<compile_context>
chip_gen: v5e
topology: v5e:2x2
jax: 0.10.0
libtpu: 0.0.40
codegen_flags: <defaults>
</compile_context>

<pallas_src>
import functools

import jax
import jax.numpy as jnp
from jax.experimental import pallas as pl
from jax.experimental.pallas import tpu as pltpu

LN_EPS = 1e-5
_VPU_FIRST_LAYER_MAX_K = 16   # below this, layer 1 runs on the VPU


def _round_up(v: int, m: int) -> int:
    return (v + m - 1) // m * m


def _embed_kernel(x_ref,
                  w1_ref, b1_ref, g1_ref, be1_ref,
                  w2_ref, b2_ref, g2_ref, be2_ref,
                  w3_ref, b3_ref, g3_ref, be3_ref,
                  o_ref, *, c_out, vpu_first_layer, matmul_dtype):
    c_pad = o_ref.shape[-1]

    if c_pad == c_out:
        mask = None
    else:
        lane = jax.lax.broadcasted_iota(jnp.int32, (1, c_pad), 1)
        mask = lane < c_out          # padded lanes excluded from LN statistics

    inv_c = 1.0 / float(c_out)

    def layer_norm(y, g_ref, be_ref, relu):
        # y's padded lanes are exactly zero (zero-padded W columns / bias), so the
        # plain sum is already the sum over the real lanes.
        mu = jnp.sum(y, axis=-1, keepdims=True) * inv_c
        d = y - mu
        d_m = d if mask is None else jnp.where(mask, d, 0.0)
        var = jnp.sum(d_m * d_m, axis=-1, keepdims=True) * inv_c
        out = d * jax.lax.rsqrt(var + LN_EPS)
        # gamma is zero-padded -> padded lanes are forced back to exactly zero.
        out = out * g_ref[...].astype(jnp.float32) + be_ref[...].astype(jnp.float32)
        if relu:
            out = jnp.maximum(out, 0.0)
        return out

    def mxu(h, w_ref, b_ref):
        return jnp.dot(h.astype(matmul_dtype), w_ref[...].astype(matmul_dtype),
                       preferred_element_type=jnp.float32) + b_ref[...].astype(jnp.float32)

    # ---- Layer 1: Linear(in_channel -> out) + LN + ReLU ----
    x = x_ref[...].astype(jnp.float32)
    if vpu_first_layer:
        # Tiny K: a handful of broadcast FMAs on the VPU beats an MXU push/pop.
        w1 = w1_ref[...].astype(jnp.float32)          # (c_in, c_pad)
        y = b1_ref[...].astype(jnp.float32)           # (1, c_pad), broadcasts up
        for k in range(x.shape[1]):                   # static, tiny trip count
            y = y + x[:, k:k + 1] * w1[k:k + 1, :]
    else:
        y = mxu(x, w1_ref, b1_ref)
    h = layer_norm(y, g1_ref, be1_ref, relu=True)

    # ---- Layer 2: Linear(out -> out) + LN + ReLU ----
    h = layer_norm(mxu(h, w2_ref, b2_ref), g2_ref, be2_ref, relu=True)

    # ---- Layer 3: Linear(out -> out) + LN ----
    h = layer_norm(mxu(h, w3_ref, b3_ref), g3_ref, be3_ref, relu=False)

    o_ref[...] = h.astype(o_ref.dtype)


def single_input_embedding(x, params, *, tile_rows=256, matmul_dtype=jnp.bfloat16):
    """x: [N, in_channel] -> [N, out_channel]."""
    n, c_in = x.shape
    c_out = params["w1"].shape[1]
    c_pad = _round_up(c_out, 128)                 # lane-dense feature dim

    use_vpu_first = c_in < _VPU_FIRST_LAYER_MAX_K
    c_in_k = c_in if use_vpu_first else _round_up(c_in, 128)

    # Row tiling: big tiles, but never bigger than the (8-aligned) problem itself.
    tile_rows = max(8, min(_round_up(tile_rows, 8), _round_up(n, 8)))
    n_pad = _round_up(n, tile_rows)
    grid = (n_pad // tile_rows,)

    def pad_to(a, shape):
        a = jnp.asarray(a, jnp.float32)
        return jnp.pad(a, [(0, s - d) for s, d in zip(shape, a.shape)])

    def row(a):
        return jnp.asarray(a, jnp.float32).reshape(1, -1)

    x_p = pad_to(x, (n_pad, c_in_k))
    w1_p = pad_to(params["w1"], (c_in_k, c_pad))
    w2_p = pad_to(params["w2"], (c_pad, c_pad))
    w3_p = pad_to(params["w3"], (c_pad, c_pad))
    b1_p, b2_p, b3_p = (pad_to(row(params[k]), (1, c_pad)) for k in ("b1", "b2", "b3"))
    # gamma is zero-padded (NOT ones) so padded lanes stay exactly zero after LN.
    g1_p, g2_p, g3_p = (pad_to(row(params[k]), (1, c_pad)) for k in ("g1", "g2", "g3"))
    be1_p, be2_p, be3_p = (pad_to(row(params[k]), (1, c_pad))
                           for k in ("beta1", "beta2", "beta3"))

    full = lambda shape: pl.BlockSpec(shape, lambda i: (0, 0))
    grid_spec = pltpu.PrefetchScalarGridSpec(
        num_scalar_prefetch=0,
        grid=grid,
        in_specs=[
            pl.BlockSpec((tile_rows, c_in_k), lambda i: (i, 0)),        # x tile
            full((c_in_k, c_pad)), full((1, c_pad)), full((1, c_pad)), full((1, c_pad)),
            full((c_pad, c_pad)), full((1, c_pad)), full((1, c_pad)), full((1, c_pad)),
            full((c_pad, c_pad)), full((1, c_pad)), full((1, c_pad)), full((1, c_pad)),
        ],
        out_specs=pl.BlockSpec((tile_rows, c_pad), lambda i: (i, 0)),
    )

    # Scoped-VMEM budget: double-buffered x/out tiles + resident params (+ headroom).
    bpe = 4
    est = (2 * tile_rows * c_in_k + 2 * tile_rows * c_pad
           + c_in_k * c_pad + 2 * c_pad * c_pad + 9 * c_pad) * bpe
    vmem_limit = int(min(max(2 * est + (8 << 20), 16 << 20), 64 << 20))

    kernel = functools.partial(_embed_kernel,
                               c_out=c_out,
                               vpu_first_layer=use_vpu_first,
                               matmul_dtype=matmul_dtype)

    out_padded = pl.pallas_call(
        kernel,
        out_shape=jax.ShapeDtypeStruct((n_pad, c_pad), x.dtype),
        grid_spec=grid_spec,
        compiler_params=pltpu.CompilerParams(
            dimension_semantics=("parallel",),
            vmem_limit_bytes=vmem_limit),
    )(x_p,
      w1_p, b1_p, g1_p, be1_p,
      w2_p, b2_p, g2_p, be2_p,
      w3_p, b3_p, g3_p, be3_p)

    return out_padded[:n, :c_out]


def init_params(key, in_channel, out_channel, dtype=jnp.float32):
    """Matches init_weights(): Linear xavier_uniform / zero bias, LN gamma=1 beta=0.
       Linear weights stored transposed vs. PyTorch, i.e. [in, out]."""
    def xavier(k, fan_in, fan_out):
        bound = (6.0 / (fan_in + fan_out)) ** 0.5
        return jax.random.uniform(k, (fan_in, fan_out), dtype,
                                  minval=-bound, maxval=bound)

    k1, k2, k3 = jax.random.split(key, 3)
    zeros = jnp.zeros((1, out_channel), dtype)
    ones = jnp.ones((1, out_channel), dtype)
    return {
        "w1": xavier(k1, in_channel, out_channel), "b1": zeros, "g1": ones, "beta1": zeros,
        "w2": xavier(k2, out_channel, out_channel), "b2": zeros, "g2": ones, "beta2": zeros,
        "w3": xavier(k3, out_channel, out_channel), "b3": zeros, "g3": ones, "beta3": zeros,
    }


def _reference(x, p, *, matmul_dtype=jnp.bfloat16):
    """Pure-JAX reference mirroring the kernel's matmul precision choices."""
    def mxu(h, w):
        return jnp.dot(h.astype(matmul_dtype), w.astype(matmul_dtype),
                       preferred_element_type=jnp.float32)

    def layer(h, w, b, g, beta, relu, vpu):
        y = (h.astype(jnp.float32) @ w.astype(jnp.float32)) if vpu else mxu(h, w)
        y = y + b
        mu = jnp.mean(y, axis=-1, keepdims=True)
        var = jnp.mean((y - mu) ** 2, axis=-1, keepdims=True)
        y = (y - mu) * jax.lax.rsqrt(var + LN_EPS) * g + beta
        return jnp.maximum(y, 0.0) if relu else y

    vpu_first = x.shape[1] < _VPU_FIRST_LAYER_MAX_K
    h = layer(x, p["w1"], p["b1"], p["g1"], p["beta1"], True, vpu_first)
    h = layer(h, p["w2"], p["b2"], p["g2"], p["beta2"], True, False)
    return layer(h, p["w3"], p["b3"], p["g3"], p["beta3"], False, False)


def _run_case(seed, n, c_in, c_out, tile_rows):
    key = jax.random.PRNGKey(seed)
    k_param, k_x = jax.random.split(key)
    params = init_params(k_param, c_in, c_out)
    x = jax.random.normal(k_x, (n, c_in), jnp.float32)

    out = jax.block_until_ready(single_input_embedding(x, params, tile_rows=tile_rows))
    ref = _reference(x, params)

    assert out.shape == (n, c_out)
    assert jnp.allclose(out, ref, atol=2e-2, rtol=2e-2), (
        f"mismatch vs reference (max abs diff {float(jnp.max(jnp.abs(out - ref)))})")


if __name__ == "__main__":
    # Small demo shape consistent with the module (HiVT node features).
    _run_case(seed=0, n=16, c_in=4, c_out=32, tile_rows=256)
    # Non-multiple N + wider channels: exercises row padding, the MXU first-layer
    # path (K padded to 128) and the masked-LayerNorm lane padding.
    _run_case(seed=1, n=500, c_in=24, c_out=64, tile_rows=256)
    print("KERNEL_OK")
</pallas_src>

<mosaic_0001>
module attributes {stable_mosaic.version = 11 : i64} {
  func.func @_embed_kernel(%arg0: i32, %arg1: memref<16x4xf32, #tpu.memory_space<vmem>>, %arg2: memref<4x128xf32, #tpu.memory_space<vmem>>, %arg3: memref<1x128xf32, #tpu.memory_space<vmem>>, %arg4: memref<1x128xf32, #tpu.memory_space<vmem>>, %arg5: memref<1x128xf32, #tpu.memory_space<vmem>>, %arg6: memref<128x128xf32, #tpu.memory_space<vmem>>, %arg7: memref<1x128xf32, #tpu.memory_space<vmem>>, %arg8: memref<1x128xf32, #tpu.memory_space<vmem>>, %arg9: memref<1x128xf32, #tpu.memory_space<vmem>>, %arg10: memref<128x128xf32, #tpu.memory_space<vmem>>, %arg11: memref<1x128xf32, #tpu.memory_space<vmem>>, %arg12: memref<1x128xf32, #tpu.memory_space<vmem>>, %arg13: memref<1x128xf32, #tpu.memory_space<vmem>>, %arg14: memref<16x128xf32, #tpu.memory_space<vmem>>) attributes {dimension_semantics = [#tpu.dimension_semantics<parallel>], iteration_bounds = array<i64: 1>, scalar_prefetch = 0 : i64, scratch_operands = 0 : i64, tpu.core_type = #tpu.core_type<tc>, window_params = [{transform_indices = @transform_0, window_bounds = array<i64: 16, 4>}, {pipeline_mode = #tpu.pipeline_mode<synchronous>, transform_indices = @transform_1, window_bounds = array<i64: 4, 128>}, {pipeline_mode = #tpu.pipeline_mode<synchronous>, transform_indices = @transform_2, window_bounds = array<i64: 1, 128>}, {pipeline_mode = #tpu.pipeline_mode<synchronous>, transform_indices = @transform_3, window_bounds = array<i64: 1, 128>}, {pipeline_mode = #tpu.pipeline_mode<synchronous>, transform_indices = @transform_4, window_bounds = array<i64: 1, 128>}, {pipeline_mode = #tpu.pipeline_mode<synchronous>, transform_indices = @transform_5, window_bounds = array<i64: 128, 128>}, {pipeline_mode = #tpu.pipeline_mode<synchronous>, transform_indices = @transform_6, window_bounds = array<i64: 1, 128>}, {pipeline_mode = #tpu.pipeline_mode<synchronous>, transform_indices = @transform_7, window_bounds = array<i64: 1, 128>}, {pipeline_mode = #tpu.pipeline_mode<synchronous>, transform_indices = @transform_8, window_bounds = array<i64: 1, 128>}, {pipeline_mode = #tpu.pipeline_mode<synchronous>, transform_indices = @transform_9, window_bounds = array<i64: 128, 128>}, {pipeline_mode = #tpu.pipeline_mode<synchronous>, transform_indices = @transform_10, window_bounds = array<i64: 1, 128>}, {pipeline_mode = #tpu.pipeline_mode<synchronous>, transform_indices = @transform_11, window_bounds = array<i64: 1, 128>}, {pipeline_mode = #tpu.pipeline_mode<synchronous>, transform_indices = @transform_12, window_bounds = array<i64: 1, 128>}, {transform_indices = @transform_13, window_bounds = array<i64: 16, 128>}]} {
    %0 = tpu.iota {dimensions = array<i32: 1>} : vector<1x128xi32>
    %c32_i32 = arith.constant 32 : i32
    %1 = vector.broadcast %c32_i32 : i32 to vector<1x128xi32>
    %2 = arith.cmpi slt, %0, %1 : vector<1x128xi32>
    %c0 = arith.constant 0 : index
    %c0_0 = arith.constant 0 : index
    %3 = vector.load %arg1[%c0, %c0_0] : memref<16x4xf32, #tpu.memory_space<vmem>>, vector<16x4xf32>
    %c0_1 = arith.constant 0 : index
    %c0_2 = arith.constant 0 : index
    %4 = vector.load %arg2[%c0_1, %c0_2] : memref<4x128xf32, #tpu.memory_space<vmem>>, vector<4x128xf32>
    %c0_3 = arith.constant 0 : index
    %c0_4 = arith.constant 0 : index
    %5 = vector.load %arg3[%c0_3, %c0_4] : memref<1x128xf32, #tpu.memory_space<vmem>>, vector<1x128xf32>
    %6 = vector.extract_strided_slice %3 {offsets = [0, 0], sizes = [16, 1], strides = [1, 1]} : vector<16x4xf32> to vector<16x1xf32>
    %7 = vector.extract_strided_slice %4 {offsets = [0, 0], sizes = [1, 128], strides = [1, 1]} : vector<4x128xf32> to vector<1x128xf32>
    %8 = vector.broadcast %6 : vector<16x1xf32> to vector<16x128xf32>
    %9 = vector.broadcast %7 : vector<1x128xf32> to vector<16x128xf32>
    %10 = arith.mulf %8, %9 : vector<16x128xf32>
    %11 = vector.broadcast %5 : vector<1x128xf32> to vector<16x128xf32>
    %12 = arith.addf %11, %10 : vector<16x128xf32>
    %13 = vector.extract_strided_slice %3 {offsets = [0, 1], sizes = [16, 1], strides = [1, 1]} : vector<16x4xf32> to vector<16x1xf32>
    %14 = vector.extract_strided_slice %4 {offsets = [1, 0], sizes = [1, 128], strides = [1, 1]} : vector<4x128xf32> to vector<1x128xf32>
    %15 = vector.broadcast %13 : vector<16x1xf32> to vector<16x128xf32>
    %16 = vector.broadcast %14 : vector<1x128xf32> to vector<16x128xf32>
    %17 = arith.mulf %15, %16 : vector<16x128xf32>
    %18 = arith.addf %12, %17 : vector<16x128xf32>
    %19 = vector.extract_strided_slice %3 {offsets = [0, 2], sizes = [16, 1], strides = [1, 1]} : vector<16x4xf32> to vector<16x1xf32>
    %20 = vector.extract_strided_slice %4 {offsets = [2, 0], sizes = [1, 128], strides = [1, 1]} : vector<4x128xf32> to vector<1x128xf32>
    %21 = vector.broadcast %19 : vector<16x1xf32> to vector<16x128xf32>
    %22 = vector.broadcast %20 : vector<1x128xf32> to vector<16x128xf32>
    %23 = arith.mulf %21, %22 : vector<16x128xf32>
    %24 = arith.addf %18, %23 : vector<16x128xf32>
    %25 = vector.extract_strided_slice %3 {offsets = [0, 3], sizes = [16, 1], strides = [1, 1]} : vector<16x4xf32> to vector<16x1xf32>
    %26 = vector.extract_strided_slice %4 {offsets = [3, 0], sizes = [1, 128], strides = [1, 1]} : vector<4x128xf32> to vector<1x128xf32>
    %27 = vector.broadcast %25 : vector<16x1xf32> to vector<16x128xf32>
    %28 = vector.broadcast %26 : vector<1x128xf32> to vector<16x128xf32>
    %29 = arith.mulf %27, %28 : vector<16x128xf32>
    %30 = arith.addf %24, %29 : vector<16x128xf32>
    %cst = arith.constant dense<0.000000e+00> : vector<16xf32>
    %31 = vector.multi_reduction <add>, %30, %cst [1] : vector<16x128xf32> to vector<16xf32>
    %32 = vector.shape_cast %31 : vector<16xf32> to vector<16x1xf32>
    %cst_5 = arith.constant 3.125000e-02 : f32
    %33 = vector.broadcast %cst_5 : f32 to vector<16x1xf32>
    %34 = arith.mulf %32, %33 : vector<16x1xf32>
    %35 = vector.broadcast %34 : vector<16x1xf32> to vector<16x128xf32>
    %36 = arith.subf %30, %35 : vector<16x128xf32>
    %cst_6 = arith.constant 0.000000e+00 : f32
    %37 = vector.shape_cast %2 : vector<1x128xi1> to vector<1x128xi1>
    %38 = vector.broadcast %37 : vector<1x128xi1> to vector<16x128xi1>
    %39 = vector.broadcast %cst_6 : f32 to vector<16x128xf32>
    %40 = arith.select %38, %36, %39 : vector<16x128xi1>, vector<16x128xf32>
    %41 = arith.mulf %40, %40 : vector<16x128xf32>
    %cst_7 = arith.constant dense<0.000000e+00> : vector<16xf32>
    %42 = vector.multi_reduction <add>, %41, %cst_7 [1] : vector<16x128xf32> to vector<16xf32>
    %43 = vector.shape_cast %42 : vector<16xf32> to vector<16x1xf32>
    %cst_8 = arith.constant 3.125000e-02 : f32
    %44 = vector.broadcast %cst_8 : f32 to vector<16x1xf32>
    %45 = arith.mulf %43, %44 : vector<16x1xf32>
    %cst_9 = arith.constant 9.99999974E-6 : f32
    %46 = vector.broadcast %cst_9 : f32 to vector<16x1xf32>
    %47 = arith.addf %45, %46 : vector<16x1xf32>
    %48 = math.rsqrt %47 : vector<16x1xf32>
    %49 = vector.broadcast %48 : vector<16x1xf32> to vector<16x128xf32>
    %50 = arith.mulf %36, %49 : vector<16x128xf32>
    %c0_10 = arith.constant 0 : index
    %c0_11 = arith.constant 0 : index
    %51 = vector.load %arg4[%c0_10, %c0_11] : memref<1x128xf32, #tpu.memory_space<vmem>>, vector<1x128xf32>
    %52 = vector.broadcast %51 : vector<1x128xf32> to vector<16x128xf32>
    %53 = arith.mulf %50, %52 : vector<16x128xf32>
    %c0_12 = arith.constant 0 : index
    %c0_13 = arith.constant 0 : index
    %54 = vector.load %arg5[%c0_12, %c0_13] : memref<1x128xf32, #tpu.memory_space<vmem>>, vector<1x128xf32>
    %55 = vector.broadcast %54 : vector<1x128xf32> to vector<16x128xf32>
    %56 = arith.addf %53, %55 : vector<16x128xf32>
    %cst_14 = arith.constant 0.000000e+00 : f32
    %57 = vector.broadcast %cst_14 : f32 to vector<16x128xf32>
    %58 = arith.maximumf %56, %57 : vector<16x128xf32>
    %59 = arith.truncf %58 : vector<16x128xf32> to vector<16x128xbf16>
    %c0_15 = arith.constant 0 : index
    %c0_16 = arith.constant 0 : index
    %60 = vector.load %arg6[%c0_15, %c0_16] : memref<128x128xf32, #tpu.memory_space<vmem>>, vector<128x128xf32>
    %61 = arith.truncf %60 : vector<128x128xf32> to vector<128x128xbf16>
    %cst_17 = arith.constant dense<0.000000e+00> : vector<16x128xf32>
    %62 = tpu.matmul %59, %61, %cst_17 {dimension_numbers = #tpu.dot_dimension_numbers<[1], [0], [0], [1], [0, 0, 1, 1], [], []>} : vector<16x128xbf16>, vector<128x128xbf16>, vector<16x128xf32> -> vector<16x128xf32>
    %c0_18 = arith.constant 0 : index
    %c0_19 = arith.constant 0 : index
    %63 = vector.load %arg7[%c0_18, %c0_19] : memref<1x128xf32, #tpu.memory_space<vmem>>, vector<1x128xf32>
    %64 = vector.broadcast %63 : vector<1x128xf32> to vector<16x128xf32>
    %65 = arith.addf %62, %64 : vector<16x128xf32>
    %cst_20 = arith.constant dense<0.000000e+00> : vector<16xf32>
    %66 = vector.multi_reduction <add>, %65, %cst_20 [1] : vector<16x128xf32> to vector<16xf32>
    %67 = vector.shape_cast %66 : vector<16xf32> to vector<16x1xf32>
    %cst_21 = arith.constant 3.125000e-02 : f32
    %68 = vector.broadcast %cst_21 : f32 to vector<16x1xf32>
    %69 = arith.mulf %67, %68 : vector<16x1xf32>
    %70 = vector.broadcast %69 : vector<16x1xf32> to vector<16x128xf32>
    %71 = arith.subf %65, %70 : vector<16x128xf32>
    %cst_22 = arith.constant 0.000000e+00 : f32
    %72 = vector.shape_cast %2 : vector<1x128xi1> to vector<1x128xi1>
    %73 = vector.broadcast %72 : vector<1x128xi1> to vector<16x128xi1>
    %74 = vector.broadcast %cst_22 : f32 to vector<16x128xf32>
    %75 = arith.select %73, %71, %74 : vector<16x128xi1>, vector<16x128xf32>
    %76 = arith.mulf %75, %75 : vector<16x128xf32>
    %cst_23 = arith.constant dense<0.000000e+00> : vector<16xf32>
    %77 = vector.multi_reduction <add>, %76, %cst_23 [1] : vector<16x128xf32> to vector<16xf32>
    %78 = vector.shape_cast %77 : vector<16xf32> to vector<16x1xf32>
    %cst_24 = arith.constant 3.125000e-02 : f32
    %79 = vector.broadcast %cst_24 : f32 to vector<16x1xf32>
    %80 = arith.mulf %78, %79 : vector<16x1xf32>
    %cst_25 = arith.constant 9.99999974E-6 : f32
    %81 = vector.broadcast %cst_25 : f32 to vector<16x1xf32>
    %82 = arith.addf %80, %81 : vector<16x1xf32>
    %83 = math.rsqrt %82 : vector<16x1xf32>
    %84 = vector.broadcast %83 : vector<16x1xf32> to vector<16x128xf32>
    %85 = arith.mulf %71, %84 : vector<16x128xf32>
    %c0_26 = arith.constant 0 : index
    %c0_27 = arith.constant 0 : index
    %86 = vector.load %arg8[%c0_26, %c0_27] : memref<1x128xf32, #tpu.memory_space<vmem>>, vector<1x128xf32>
    %87 = vector.broadcast %86 : vector<1x128xf32> to vector<16x128xf32>
    %88 = arith.mulf %85, %87 : vector<16x128xf32>
    %c0_28 = arith.constant 0 : index
    %c0_29 = arith.constant 0 : index
    %89 = vector.load %arg9[%c0_28, %c0_29] : memref<1x128xf32, #tpu.memory_space<vmem>>, vector<1x128xf32>
    %90 = vector.broadcast %89 : vector<1x128xf32> to vector<16x128xf32>
    %91 = arith.addf %88, %90 : vector<16x128xf32>
    %cst_30 = arith.constant 0.000000e+00 : f32
    %92 = vector.broadcast %cst_30 : f32 to vector<16x128xf32>
    %93 = arith.maximumf %91, %92 : vector<16x128xf32>
    %94 = arith.truncf %93 : vector<16x128xf32> to vector<16x128xbf16>
    %c0_31 = arith.constant 0 : index
    %c0_32 = arith.constant 0 : index
    %95 = vector.load %arg10[%c0_31, %c0_32] : memref<128x128xf32, #tpu.memory_space<vmem>>, vector<128x128xf32>
    %96 = arith.truncf %95 : vector<128x128xf32> to vector<128x128xbf16>
    %cst_33 = arith.constant dense<0.000000e+00> : vector<16x128xf32>
    %97 = tpu.matmul %94, %96, %cst_33 {dimension_numbers = #tpu.dot_dimension_numbers<[1], [0], [0], [1], [0, 0, 1, 1], [], []>} : vector<16x128xbf16>, vector<128x128xbf16>, vector<16x128xf32> -> vector<16x128xf32>
    %c0_34 = arith.constant 0 : index
    %c0_35 = arith.constant 0 : index
    %98 = vector.load %arg11[%c0_34, %c0_35] : memref<1x128xf32, #tpu.memory_space<vmem>>, vector<1x128xf32>
    %99 = vector.broadcast %98 : vector<1x128xf32> to vector<16x128xf32>
    %100 = arith.addf %97, %99 : vector<16x128xf32>
    %cst_36 = arith.constant dense<0.000000e+00> : vector<16xf32>
    %101 = vector.multi_reduction <add>, %100, %cst_36 [1] : vector<16x128xf32> to vector<16xf32>
    %102 = vector.shape_cast %101 : vector<16xf32> to vector<16x1xf32>
    %cst_37 = arith.constant 3.125000e-02 : f32
    %103 = vector.broadcast %cst_37 : f32 to vector<16x1xf32>
    %104 = arith.mulf %102, %103 : vector<16x1xf32>
    %105 = vector.broadcast %104 : vector<16x1xf32> to vector<16x128xf32>
    %106 = arith.subf %100, %105 : vector<16x128xf32>
    %cst_38 = arith.constant 0.000000e+00 : f32
    %107 = vector.shape_cast %2 : vector<1x128xi1> to vector<1x128xi1>
    %108 = vector.broadcast %107 : vector<1x128xi1> to vector<16x128xi1>
    %109 = vector.broadcast %cst_38 : f32 to vector<16x128xf32>
    %110 = arith.select %108, %106, %109 : vector<16x128xi1>, vector<16x128xf32>
    %111 = arith.mulf %110, %110 : vector<16x128xf32>
    %cst_39 = arith.constant dense<0.000000e+00> : vector<16xf32>
    %112 = vector.multi_reduction <add>, %111, %cst_39 [1] : vector<16x128xf32> to vector<16xf32>
    %113 = vector.shape_cast %112 : vector<16xf32> to vector<16x1xf32>
    %cst_40 = arith.constant 3.125000e-02 : f32
    %114 = vector.broadcast %cst_40 : f32 to vector<16x1xf32>
    %115 = arith.mulf %113, %114 : vector<16x1xf32>
    %cst_41 = arith.constant 9.99999974E-6 : f32
    %116 = vector.broadcast %cst_41 : f32 to vector<16x1xf32>
    %117 = arith.addf %115, %116 : vector<16x1xf32>
    %118 = math.rsqrt %117 : vector<16x1xf32>
    %119 = vector.broadcast %118 : vector<16x1xf32> to vector<16x128xf32>
    %120 = arith.mulf %106, %119 : vector<16x128xf32>
    %c0_42 = arith.constant 0 : index
    %c0_43 = arith.constant 0 : index
    %121 = vector.load %arg12[%c0_42, %c0_43] : memref<1x128xf32, #tpu.memory_space<vmem>>, vector<1x128xf32>
    %122 = vector.broadcast %121 : vector<1x128xf32> to vector<16x128xf32>
    %123 = arith.mulf %120, %122 : vector<16x128xf32>
    %c0_44 = arith.constant 0 : index
    %c0_45 = arith.constant 0 : index
    %124 = vector.load %arg13[%c0_44, %c0_45] : memref<1x128xf32, #tpu.memory_space<vmem>>, vector<1x128xf32>
    %125 = vector.broadcast %124 : vector<1x128xf32> to vector<16x128xf32>
    %126 = arith.addf %123, %125 : vector<16x128xf32>
    %c0_46 = arith.constant 0 : index
    %c0_47 = arith.constant 0 : index
    %127 = vector.load %arg14[%c0_46, %c0_47] : memref<16x128xf32, #tpu.memory_space<vmem>>, vector<16x128xf32>
    tpu.vector_store %arg14[%c0_46, %c0_47], %126 {strides = array<i32>} : memref<16x128xf32, #tpu.memory_space<vmem>>, vector<16x128xf32>,
    return
  }
  func.func @transform_0(%arg0: i32) -> (i32, i32) {
    %c0_i32 = arith.constant 0 : i32
    %c0_i32_0 = arith.constant 0 : i32
    return %arg0, %c0_i32 : i32, i32
  }
  func.func @transform_1(%arg0: i32) -> (i32, i32) {
    %c0_i32 = arith.constant 0 : i32
    %c0_i32_0 = arith.constant 0 : i32
    %c0_i32_1 = arith.constant 0 : i32
    return %c0_i32, %c0_i32_0 : i32, i32
  }
  func.func @transform_2(%arg0: i32) -> (i32, i32) {
    %c0_i32 = arith.constant 0 : i32
    %c0_i32_0 = arith.constant 0 : i32
    %c0_i32_1 = arith.constant 0 : i32
    return %c0_i32, %c0_i32_0 : i32, i32
  }
  func.func @transform_3(%arg0: i32) -> (i32, i32) {
    %c0_i32 = arith.constant 0 : i32
    %c0_i32_0 = arith.constant 0 : i32
    %c0_i32_1 = arith.constant 0 : i32
    return %c0_i32, %c0_i32_0 : i32, i32
  }
  func.func @transform_4(%arg0: i32) -> (i32, i32) {
    %c0_i32 = arith.constant 0 : i32
    %c0_i32_0 = arith.constant 0 : i32
    %c0_i32_1 = arith.constant 0 : i32
    return %c0_i32, %c0_i32_0 : i32, i32
  }
  func.func @transform_5(%arg0: i32) -> (i32, i32) {
    %c0_i32 = arith.constant 0 : i32
    %c0_i32_0 = arith.constant 0 : i32
    %c0_i32_1 = arith.constant 0 : i32
    return %c0_i32, %c0_i32_0 : i32, i32
  }
  func.func @transform_6(%arg0: i32) -> (i32, i32) {
    %c0_i32 = arith.constant 0 : i32
    %c0_i32_0 = arith.constant 0 : i32
    %c0_i32_1 = arith.constant 0 : i32
    return %c0_i32, %c0_i32_0 : i32, i32
  }
  func.func @transform_7(%arg0: i32) -> (i32, i32) {
    %c0_i32 = arith.constant 0 : i32
    %c0_i32_0 = arith.constant 0 : i32
    %c0_i32_1 = arith.constant 0 : i32
    return %c0_i32, %c0_i32_0 : i32, i32
  }
  func.func @transform_8(%arg0: i32) -> (i32, i32) {
    %c0_i32 = arith.constant 0 : i32
    %c0_i32_0 = arith.constant 0 : i32
    %c0_i32_1 = arith.constant 0 : i32
    return %c0_i32, %c0_i32_0 : i32, i32
  }
  func.func @transform_9(%arg0: i32) -> (i32, i32) {
    %c0_i32 = arith.constant 0 : i32
    %c0_i32_0 = arith.constant 0 : i32
    %c0_i32_1 = arith.constant 0 : i32
    return %c0_i32, %c0_i32_0 : i32, i32
  }
  func.func @transform_10(%arg0: i32) -> (i32, i32) {
    %c0_i32 = arith.constant 0 : i32
    %c0_i32_0 = arith.constant 0 : i32
    %c0_i32_1 = arith.constant 0 : i32
    return %c0_i32, %c0_i32_0 : i32, i32
  }
  func.func @transform_11(%arg0: i32) -> (i32, i32) {
    %c0_i32 = arith.constant 0 : i32
    %c0_i32_0 = arith.constant 0 : i32
    %c0_i32_1 = arith.constant 0 : i32
    return %c0_i32, %c0_i32_0 : i32, i32
  }
  func.func @transform_12(%arg0: i32) -> (i32, i32) {
    %c0_i32 = arith.constant 0 : i32
    %c0_i32_0 = arith.constant 0 : i32
    %c0_i32_1 = arith.constant 0 : i32
    return %c0_i32, %c0_i32_0 : i32, i32
  }
  func.func @transform_13(%arg0: i32) -> (i32, i32) {
    %c0_i32 = arith.constant 0 : i32
    %c0_i32_0 = arith.constant 0 : i32
    return %arg0, %c0_i32 : i32, i32
  }
}

</mosaic_0001>

<llo_original>
// kernel: tpu_custom_call.1
$region0: #{tpu_custom_call.1}
  #allocation0 [shape = 'u32[]', space=smem, size = 0x4, offset = 0x4, fixed_abs, tag = 'smem constant byte address 0x4 - core index']
  #allocation1 [shape = 'u32[72,128]{1,0:T(1,128)}', space=vmem, size = 0x9000, scoped, tag = 'internal scratch']
  %s0 = inlined_call_operand.vmem [shape: f32[16,4], index: 0, kind: input, shape index: {}]
  %s1 = inlined_call_operand.vmem [shape: f32[4,128], index: 1, kind: input, shape index: {}]
  %s2 = inlined_call_operand.vmem [shape: f32[1,128], index: 2, kind: input, shape index: {}]
  %s3 = inlined_call_operand.vmem [shape: f32[1,128], index: 3, kind: input, shape index: {}]
  %s4 = inlined_call_operand.vmem [shape: f32[1,128], index: 4, kind: input, shape index: {}]
  %s5 = inlined_call_operand.hbm [shape: f32[128,128], index: 5, kind: input, shape index: {}]
  %s6 = inlined_call_operand.vmem [shape: f32[1,128], index: 6, kind: input, shape index: {}]
  %s7 = inlined_call_operand.vmem [shape: f32[1,128], index: 7, kind: input, shape index: {}]
  %s8 = inlined_call_operand.vmem [shape: f32[1,128], index: 8, kind: input, shape index: {}]
  %s9 = inlined_call_operand.hbm [shape: f32[128,128], index: 9, kind: input, shape index: {}]
  %s10 = inlined_call_operand.vmem [shape: f32[1,128], index: 10, kind: input, shape index: {}]
  %s11 = inlined_call_operand.vmem [shape: f32[1,128], index: 11, kind: input, shape index: {}]
  %s12 = inlined_call_operand.vmem [shape: f32[1,128], index: 12, kind: input, shape index: {}]
  %s13 = inlined_call_operand.hbm [shape: f32[16,128], index: 13, kind: output, shape index: {}]
  %s14 = sld [smem:[#allocation0]]
  $region70: #{tpu_custom_call.1} parent=0
    _
  %s16 = ssub.s32 1, %s14
  %s17 = scalar_select 0, %s16, %s14
  $region1: #{tpu_custom_call.1} parent=0
    #allocation2 [shape = 'u8[65536]{0}', space=vmem, size = 0x10000, scoped, tag = 'input window, operand 5, single buffered']
    #allocation3 [shape = 's32[1]{0}', space=sflag, size = 0x4, scoped, tag = 'scoped memory for tpu_custom_call.1']
    #allocation4 [shape = 's32[1]{0}', space=sflag, size = 0x4, scoped, tag = 'scoped memory for tpu_custom_call.1']
    #allocation5 [shape = 'u8[65536]{0}', space=vmem, size = 0x10000, scoped, tag = 'input window, operand 9, single buffered']
    #allocation6 [shape = 's32[1]{0}', space=sflag, size = 0x4, scoped, tag = 'scoped memory for tpu_custom_call.1']
    #allocation7 [shape = 'u8[8192]{0}', space=vmem, size = 0x2000, scoped, tag = 'output window, operand 0, single buffered']
    %18 = vsyncpa [#allocation3], 0
    %19 = vsyncpa [#allocation6], 0
    %20 = vsyncpa [#allocation4], 0
    // Predicated region
    $region2: #{tpu_custom_call.1} parent=1 // pred_check
      _
    $region3: #{tpu_custom_call.1} parent=1 // pred_check_branch
      %22 = sbr.rel (0) target = $region5
    $region4: #{tpu_custom_call.1} parent=1 // pred_region
      _
    $region5: #{tpu_custom_call.1} parent=1 // pred_fallthru
      _
    // Predicated region
    $region6: #{tpu_custom_call.1} parent=1 // pred_check
      _
    $region7: #{tpu_custom_call.1} parent=1 // pred_check_branch
      %24 = sbr.rel (0) target = $region9
    $region8: #{tpu_custom_call.1} parent=1 // pred_region
      _
    $region9: #{tpu_custom_call.1} parent=1 // pred_fallthru
      _
    // Predicated region
    $region10: #{tpu_custom_call.1} parent=1 // pred_check
      _
    $region11: #{tpu_custom_call.1} parent=1 // pred_check_branch
      %26 = sbr.rel (0) target = $region13
    $region12: #{tpu_custom_call.1} parent=1 // pred_region
      _
    $region13: #{tpu_custom_call.1} parent=1 // pred_fallthru
      _
    // Predicated region
    $region14: #{tpu_custom_call.1} parent=1 // pred_check
      _
    $region15: #{tpu_custom_call.1} parent=1 // pred_check_branch
      %28 = sbr.rel (0) target = $region17
    $region16: #{tpu_custom_call.1} parent=1 // pred_region
      _
    $region17: #{tpu_custom_call.1} parent=1 // pred_fallthru
      _
    // Predicated region
    $region18: #{tpu_custom_call.1} parent=1 // pred_check
      _
    $region19: #{tpu_custom_call.1} parent=1 // pred_check_branch
      %30 = sbr.rel (0) target = $region21
    $region20: #{tpu_custom_call.1} parent=1 // pred_region
      _
    $region21: #{tpu_custom_call.1} parent=1 // pred_fallthru
      _
    // Predicated region
    $region22: #{tpu_custom_call.1} parent=1 // pred_check
      _
    $region23: #{tpu_custom_call.1} parent=1 // pred_check_branch
      %32 = sbr.rel (0) target = $region25
    $region24: #{tpu_custom_call.1} parent=1 // pred_region
      %34 = vsyncadd [#allocation3], 0
      %s35 = sshll.u32 %s5, 4
      %s36 = int_to_ptr.hbm [resolvable:$true] %s35
      %s37 = sshll.u32 [#allocation2], 4
      %s38 = int_to_ptr.vmem [resolvable:$true] %s37
      %43 = dma.hbm_to_vmem [thread:$0]  %s36, 2048, %s38, [#allocation3], 128, 128, 8
    $region25: #{tpu_custom_call.1} parent=1 // pred_fallthru
      _
    // Predicated region
    $region26: #{tpu_custom_call.1} parent=1 // pred_check
      _
    $region27: #{tpu_custom_call.1} parent=1 // pred_check_branch
      %45 = sbr.rel (0) target = $region29
    $region28: #{tpu_custom_call.1} parent=1 // pred_region
      _
    $region29: #{tpu_custom_call.1} parent=1 // pred_fallthru
      _
    // Predicated region
    $region30: #{tpu_custom_call.1} parent=1 // pred_check
      _
    $region31: #{tpu_custom_call.1} parent=1 // pred_check_branch
      %47 = sbr.rel (0) target = $region33
    $region32: #{tpu_custom_call.1} parent=1 // pred_region
      _
    $region33: #{tpu_custom_call.1} parent=1 // pred_fallthru
      _
    // Predicated region
    $region34: #{tpu_custom_call.1} parent=1 // pred_check
      _
    $region35: #{tpu_custom_call.1} parent=1 // pred_check_branch
      %49 = sbr.rel (0) target = $region37
    $region36: #{tpu_custom_call.1} parent=1 // pred_region
      _
    $region37: #{tpu_custom_call.1} parent=1 // pred_fallthru
      _
    // Predicated region
    $region38: #{tpu_custom_call.1} parent=1 // pred_check
      _
    $region39: #{tpu_custom_call.1} parent=1 // pred_check_branch
      %51 = sbr.rel (0) target = $region41
    $region40: #{tpu_custom_call.1} parent=1 // pred_region
      %53 = vsyncadd [#allocation6], 0
      %s54 = sshll.u32 %s9, 4
      %s55 = int_to_ptr.hbm [resolvable:$true] %s54
      %s56 = sshll.u32 [#allocation5], 4
      %s57 = int_to_ptr.vmem [resolvable:$true] %s56
      %62 = dma.hbm_to_vmem [thread:$0]  %s55, 2048, %s57, [#allocation6], 128, 128, 8
    $region41: #{tpu_custom_call.1} parent=1 // pred_fallthru
      _
    // Predicated region
    $region42: #{tpu_custom_call.1} parent=1 // pred_check
      _
    $region43: #{tpu_custom_call.1} parent=1 // pred_check_branch
      %64 = sbr.rel (0) target = $region45
    $region44: #{tpu_custom_call.1} parent=1 // pred_region
      _
    $region45: #{tpu_custom_call.1} parent=1 // pred_fallthru
      _
    // Predicated region
    $region46: #{tpu_custom_call.1} parent=1 // pred_check
      _
    $region47: #{tpu_custom_call.1} parent=1 // pred_check_branch
      %66 = sbr.rel (0) target = $region49
    $region48: #{tpu_custom_call.1} parent=1 // pred_region
      _
    $region49: #{tpu_custom_call.1} parent=1 // pred_fallthru
      _
    // Predicated region
    $region50: #{tpu_custom_call.1} parent=1 // pred_check
      _
    $region51: #{tpu_custom_call.1} parent=1 // pred_check_branch
      %68 = sbr.rel (0) target = $region53
    $region52: #{tpu_custom_call.1} parent=1 // pred_region
      _
    $region53: #{tpu_custom_call.1} parent=1 // pred_fallthru
      _
    // Predicated region
    $region54: #{tpu_custom_call.1} parent=1 // pred_check
      _
    $region55: #{tpu_custom_call.1} parent=1 // pred_check_branch
      %70 = sbr.rel (0) target = $region57
    $region56: #{tpu_custom_call.1} parent=1 // pred_region
      %72 = dma.done [#allocation3], 2048
    $region57: #{tpu_custom_call.1} parent=1 // pred_fallthru
      _
    // Predicated region
    $region58: #{tpu_custom_call.1} parent=1 // pred_check
      _
    $region59: #{tpu_custom_call.1} parent=1 // pred_check_branch
      %74 = sbr.rel (0) target = $region61
    $region60: #{tpu_custom_call.1} parent=1 // pred_region
      %76 = dma.done [#allocation6], 2048
    $region61: #{tpu_custom_call.1} parent=1 // pred_fallthru
      _
    %v77 = vlaneseq
    %v78 = vand.u32 %v77, 127
    %vm79 = vcmp.lt.s32.totalorder %v78, 32
    %v80 = vld [vmem:[%s0] sm:$0xff]
    %v81 = vld [vmem:[%s0 + $0x8] sm:$0xff]
    %v82 = vld [vmem:[%s1] sm:$0xf]
    %v83 = vld [vmem:[%s2] sm:$0x1]
    %85 = vset.pattern.permute.xlu0 0
    %86 = vperm.xlu0 %85, %v80
    %v87 = vpop.permute.xlu0 %86
    %90 = vset.pattern.permute.xlu0 0
    %91 = vperm.xlu0 %90, %v81
    %v92 = vpop.permute.xlu0 %91
    %v94 = vperm.slane %v82, 0
    %v95 = vmul.f32 %v87, %v94
    %v96 = vmul.f32 %v92, %v94
    %v98 = vperm.slane %v83, 0
    %v100 = vadd.f32 %v98, %v95
    %v101 = vadd.f32 %v98, %v96
    %102 = vset.pattern.permute.xlu0 1
    %103 = vperm.xlu0 %102, %v80
    %v104 = vpop.permute.xlu0 %103
    %106 = vset.pattern.permute.xlu0 1
    %107 = vperm.xlu0 %106, %v81
    %v108 = vpop.permute.xlu0 %107
    %v110 = vperm.slane %v82, 1
    %v111 = vmul.f32 %v104, %v110
    %v112 = vmul.f32 %v108, %v110
    %v113 = vadd.f32 %v100, %v111
    %v114 = vadd.f32 %v101, %v112
    %115 = vset.pattern.permute.xlu0 2
    %116 = vperm.xlu0 %115, %v80
    %v117 = vpop.permute.xlu0 %116
    %119 = vset.pattern.permute.xlu0 2
    %120 = vperm.xlu0 %119, %v81
    %v121 = vpop.permute.xlu0 %120
    %v123 = vperm.slane %v82, 2
    %v124 = vmul.f32 %v117, %v123
    %v125 = vmul.f32 %v121, %v123
    %v126 = vadd.f32 %v113, %v124
    %v127 = vadd.f32 %v114, %v125
    %128 = vset.pattern.permute.xlu0 3
    %129 = vperm.xlu0 %128, %v80
    %v130 = vpop.permute.xlu0 %129
    %132 = vset.pattern.permute.xlu0 3
    %133 = vperm.xlu0 %132, %v81
    %v134 = vpop.permute.xlu0 %133
    %v136 = vperm.slane %v82, 3
    %v137 = vmul.f32 %v130, %v136
    %v138 = vmul.f32 %v134, %v136
    %v139 = vadd.f32 %v126, %v137
    %v140 = vadd.f32 %v127, %v138
    %141 = vadd.xlane.f32.xlu0 %v139
    %v142 = vpop.xlane.xlu0 %141
    %143 = vadd.xlane.f32.xlu0 %v140
    %v144 = vpop.xlane.xlu0 %143
    %v145 = vmul.f32 %v142, 0.03125
    %v146 = vmul.f32 %v144, 0.03125
    %v147 = vsub.f32 %v139, %v145
    %v148 = vsub.f32 %v140, %v146
    %v149 = vsel %vm79, 1, 0
    %vm150 = vcmp.eq.s32.totalorder %v149, 1
    %v151 = vsel %vm150, %v147, 0.0
    %v152 = vsel %vm150, %v148, 0.0
    %v153 = vmul.f32 %v151, %v151
    %v154 = vmul.f32 %v152, %v152
    %155 = vadd.xlane.f32.xlu0 %v153
    %v156 = vpop.xlane.xlu0 %155
    %157 = vadd.xlane.f32.xlu0 %v154
    %v158 = vpop.xlane.xlu0 %157
    %v159 = vmul.f32 %v156, 0.03125
    %v160 = vmul.f32 %v158, 0.03125
    %v161 = vadd.f32 %v159, 1e-05
    %v162 = vadd.f32 %v160, 1e-05
    %v163 = vrsqrt.pop %v161
    %v164 = vmul.f32 %v163, %v161
    %v165 = vmul.f32 %v164, %v163
    %v166 = vmul.f32 0.5, %v165
    %v167 = vsub.f32 1.5, %v166
    %v168 = vmul.f32 %v163, %v167
    %vm169 = vweird.f32 %v161
    %vm170 = vweird.f32 %v163
    %vm171 = vmor %vm169, %vm170
    %v172 = vsel %vm171, %v163, %v168
    %v173 = vrsqrt.pop %v162
    %v174 = vmul.f32 %v173, %v162
    %v175 = vmul.f32 %v174, %v173
    %v176 = vmul.f32 0.5, %v175
    %v177 = vsub.f32 1.5, %v176
    %v178 = vmul.f32 %v173, %v177
    %vm179 = vweird.f32 %v162
    %vm180 = vweird.f32 %v173
    %vm181 = vmor %vm179, %vm180
    %v182 = vsel %vm181, %v173, %v178
    %v183 = vmul.f32 %v147, %v172
    %v184 = vmul.f32 %v148, %v182
    %v185 = vld [vmem:[%s3] sm:$0x1]
    %v187 = vperm.slane %v185, 0
    %v189 = vmul.f32 %v183, %v187
    %v190 = vmul.f32 %v184, %v187
    %v191 = vld [vmem:[%s4] sm:$0x1]
    %v193 = vperm.slane %v191, 0
    %v195 = vadd.f32 %v189, %v193
    %v196 = vadd.f32 %v190, %v193
    %v197 = vmax.f32 %v195, 0.0
    %v198 = vmax.f32 %v196, 0.0
    %v199 = vpack.c.bf16 %v198, %v197
    %v200 = vld [vmem:[#allocation2] sm:$0xff]
    %v201 = vld [vmem:[#allocation2 + $0x8] sm:$0xff]
    %v202 = vld [vmem:[#allocation2 + $0x10] sm:$0xff]
    %v203 = vld [vmem:[#allocation2 + $0x18] sm:$0xff]
    %v204 = vld [vmem:[#allocation2 + $0x20] sm:$0xff]
    %v205 = vld [vmem:[#allocation2 + $0x28] sm:$0xff]
    %v206 = vld [vmem:[#allocation2 + $0x30] sm:$0xff]
    %v207 = vld [vmem:[#allocation2 + $0x38] sm:$0xff]
    %v208 = vld [vmem:[#allocation2 + $0x40] sm:$0xff]
    %v209 = vld [vmem:[#allocation2 + $0x48] sm:$0xff]
    %v210 = vld [vmem:[#allocation2 + $0x50] sm:$0xff]
    %v211 = vld [vmem:[#allocation2 + $0x58] sm:$0xff]
    %v212 = vld [vmem:[#allocation2 + $0x60] sm:$0xff]
    %v213 = vld [vmem:[#allocation2 + $0x68] sm:$0xff]
    %v214 = vld [vmem:[#allocation2 + $0x70] sm:$0xff]
    %v215 = vld [vmem:[#allocation2 + $0x78] sm:$0xff]
    %v216 = vpack.c.bf16 %v201, %v200
    %v217 = vpack.c.bf16 %v203, %v202
    %v218 = vpack.c.bf16 %v205, %v204
    %v219 = vpack.c.bf16 %v207, %v206
    %v220 = vpack.c.bf16 %v209, %v208
    %v221 = vpack.c.bf16 %v211, %v210
    %v222 = vpack.c.bf16 %v213, %v212
    %v223 = vpack.c.bf16 %v215, %v214
    %v224 = vld [vmem:[%s6] sm:$0x1]
    %v226 = vperm.slane %v224, 0
    %228 = vmatpush.bf16.msra.mxu0 %v223
    %229 = vmatpush.bf16.msra.mxu0 %v222
    %230 = vmatpush.bf16.msra.mxu0 %v221
    %231 = vmatpush.bf16.msra.mxu0 %v220
    %232 = vmatpush.bf16.msra.mxu0 %v219
    %233 = vmatpush.bf16.msra.mxu0 %v218
    %234 = vmatpush.bf16.msra.mxu0 %v217
    %235 = vmatpush.bf16.msra.mxu0 %v216
    %236 = vmatmul.bf16.gmra.mxu0 %v199
    %v237 = vpop.f32.mrf.mxu0
    %v238 = vadd.f32 %v226, %v237
    %v239 = vpop.f32.mrf.mxu0
    %v240 = vadd.f32 %v226, %v239
    %241 = vdwg.mxu0
    %242 = vadd.xlane.f32.xlu0 %v238
    %v243 = vpop.xlane.xlu0 %242
    %244 = vadd.xlane.f32.xlu0 %v240
    %v245 = vpop.xlane.xlu0 %244
    %v246 = vmul.f32 %v243, 0.03125
    %v247 = vmul.f32 %v245, 0.03125
    %v248 = vsub.f32 %v238, %v246
    %v249 = vsub.f32 %v240, %v247
    %v250 = vsel %vm150, %v248, 0.0
    %v251 = vsel %vm150, %v249, 0.0
    %v252 = vmul.f32 %v250, %v250
    %v253 = vmul.f32 %v251, %v251
    %254 = vadd.xlane.f32.xlu0 %v252
    %v255 = vpop.xlane.xlu0 %254
    %256 = vadd.xlane.f32.xlu0 %v253
    %v257 = vpop.xlane.xlu0 %256
    %v258 = vmul.f32 %v255, 0.03125
    %v259 = vmul.f32 %v257, 0.03125
    %v260 = vadd.f32 %v258, 1e-05
    %v261 = vadd.f32 %v259, 1e-05
    %v262 = vrsqrt.pop %v260
    %v263 = vmul.f32 %v262, %v260
    %v264 = vmul.f32 %v263, %v262
    %v265 = vmul.f32 0.5, %v264
    %v266 = vsub.f32 1.5, %v265
    %v267 = vmul.f32 %v262, %v266
    %vm268 = vweird.f32 %v260
    %vm269 = vweird.f32 %v262
    %vm270 = vmor %vm268, %vm269
    %v271 = vsel %vm270, %v262, %v267
    %v272 = vrsqrt.pop %v261
    %v273 = vmul.f32 %v272, %v261
    %v274 = vmul.f32 %v273, %v272
    %v275 = vmul.f32 0.5, %v274
    %v276 = vsub.f32 1.5, %v275
    %v277 = vmul.f32 %v272, %v276
    %vm278 = vweird.f32 %v261
    %vm279 = vweird.f32 %v272
    %vm280 = vmor %vm278, %vm279
    %v281 = vsel %vm280, %v272, %v277
    %v282 = vmul.f32 %v248, %v271
    %v283 = vmul.f32 %v249, %v281
    %v284 = vld [vmem:[%s7] sm:$0x1]
    %v286 = vperm.slane %v284, 0
    %v288 = vmul.f32 %v282, %v286
    %v289 = vmul.f32 %v283, %v286
    %v290 = vld [vmem:[%s8] sm:$0x1]
    %v292 = vperm.slane %v290, 0
    %v294 = vadd.f32 %v288, %v292
    %v295 = vadd.f32 %v289, %v292
    %v296 = vmax.f32 %v294, 0.0
    %v297 = vmax.f32 %v295, 0.0
    %v298 = vpack.c.bf16 %v297, %v296
    %v299 = vld [vmem:[#allocation5] sm:$0xff]
    %v300 = vld [vmem:[#allocation5 + $0x8] sm:$0xff]
    %v301 = vld [vmem:[#allocation5 + $0x10] sm:$0xff]
    %v302 = vld [vmem:[#allocation5 + $0x18] sm:$0xff]
    %v303 = vld [vmem:[#allocation5 + $0x20] sm:$0xff]
    %v304 = vld [vmem:[#allocation5 + $0x28] sm:$0xff]
    %v305 = vld [vmem:[#allocation5 + $0x30] sm:$0xff]
    %v306 = vld [vmem:[#allocation5 + $0x38] sm:$0xff]
    %v307 = vld [vmem:[#allocation5 + $0x40] sm:$0xff]
    %v308 = vld [vmem:[#allocation5 + $0x48] sm:$0xff]
    %v309 = vld [vmem:[#allocation5 + $0x50] sm:$0xff]
    %v310 = vld [vmem:[#allocation5 + $0x58] sm:$0xff]
    %v311 = vld [vmem:[#allocation5 + $0x60] sm:$0xff]
    %v312 = vld [vmem:[#allocation5 + $0x68] sm:$0xff]
    %v313 = vld [vmem:[#allocation5 + $0x70] sm:$0xff]
    %v314 = vld [vmem:[#allocation5 + $0x78] sm:$0xff]
    %v315 = vpack.c.bf16 %v300, %v299
    %v316 = vpack.c.bf16 %v302, %v301
    %v317 = vpack.c.bf16 %v304, %v303
    %v318 = vpack.c.bf16 %v306, %v305
    %v319 = vpack.c.bf16 %v308, %v307
    %v320 = vpack.c.bf16 %v310, %v309
    %v321 = vpack.c.bf16 %v312, %v311
    %v322 = vpack.c.bf16 %v314, %v313
    %v323 = vld [vmem:[%s10] sm:$0x1]
    %v325 = vperm.slane %v323, 0
    %327 = vmatpush.bf16.msra.mxu0 %v322
    %328 = vmatpush.bf16.msra.mxu0 %v321
    %329 = vmatpush.bf16.msra.mxu0 %v320
    %330 = vmatpush.bf16.msra.mxu0 %v319
    %331 = vmatpush.bf16.msra.mxu0 %v318
    %332 = vmatpush.bf16.msra.mxu0 %v317
    %333 = vmatpush.bf16.msra.mxu0 %v316
    %334 = vmatpush.bf16.msra.mxu0 %v315
    %335 = vmatmul.bf16.gmra.mxu0 %v298
    %v336 = vpop.f32.mrf.mxu0
    %v337 = vadd.f32 %v325, %v336
    %v338 = vpop.f32.mrf.mxu0
    %v339 = vadd.f32 %v325, %v338
    %340 = vdwg.mxu0
    %341 = vadd.xlane.f32.xlu0 %v337
    %v342 = vpop.xlane.xlu0 %341
    %343 = vadd.xlane.f32.xlu0 %v339
    %v344 = vpop.xlane.xlu0 %343
    %v345 = vmul.f32 %v342, 0.03125
    %v346 = vmul.f32 %v344, 0.03125
    %v347 = vsub.f32 %v337, %v345
    %v348 = vsub.f32 %v339, %v346
    %v349 = vsel %vm150, %v347, 0.0
    %v350 = vsel %vm150, %v348, 0.0
    %v351 = vmul.f32 %v349, %v349
    %v352 = vmul.f32 %v350, %v350
    %353 = vadd.xlane.f32.xlu0 %v351
    %v354 = vpop.xlane.xlu0 %353
    %355 = vadd.xlane.f32.xlu0 %v352
    %v356 = vpop.xlane.xlu0 %355
    %v357 = vmul.f32 %v354, 0.03125
    %v358 = vmul.f32 %v356, 0.03125
    %v359 = vadd.f32 %v357, 1e-05
    %v360 = vadd.f32 %v358, 1e-05
    %v361 = vrsqrt.pop %v359
    %v362 = vmul.f32 %v361, %v359
    %v363 = vmul.f32 %v362, %v361
    %v364 = vmul.f32 0.5, %v363
    %v365 = vsub.f32 1.5, %v364
    %v366 = vmul.f32 %v361, %v365
    %vm367 = vweird.f32 %v359
    %vm368 = vweird.f32 %v361
    %vm369 = vmor %vm367, %vm368
    %v370 = vsel %vm369, %v361, %v366
    %v371 = vrsqrt.pop %v360
    %v372 = vmul.f32 %v371, %v360
    %v373 = vmul.f32 %v372, %v371
    %v374 = vmul.f32 0.5, %v373
    %v375 = vsub.f32 1.5, %v374
    %v376 = vmul.f32 %v371, %v375
    %vm377 = vweird.f32 %v360
    %vm378 = vweird.f32 %v371
    %vm379 = vmor %vm377, %vm378
    %v380 = vsel %vm379, %v371, %v376
    %v381 = vmul.f32 %v347, %v370
    %v382 = vmul.f32 %v348, %v380
    %v383 = vld [vmem:[%s11] sm:$0x1]
    %v385 = vperm.slane %v383, 0
    %v387 = vmul.f32 %v381, %v385
    %v388 = vmul.f32 %v382, %v385
    %v389 = vld [vmem:[%s12] sm:$0x1]
    %v391 = vperm.slane %v389, 0
    %v393 = vadd.f32 %v387, %v391
    %v394 = vadd.f32 %v388, %v391
    %395 = vst [vmem:[#allocation7] sm:$0xff] %v393
    %396 = vst [vmem:[#allocation7 + $0x8] sm:$0xff] %v394
    // Predicated region
    $region62: #{tpu_custom_call.1} parent=1 // pred_check
      _
    $region63: #{tpu_custom_call.1} parent=1 // pred_check_branch
      %398 = sbr.rel (0) target = $region65
    $region64: #{tpu_custom_call.1} parent=1 // pred_region
      %400 = vsyncadd [#allocation4], 0
      %s401 = sshll.u32 [#allocation7], 4
      %s402 = int_to_ptr.vmem [resolvable:$true] %s401
      %s403 = sshll.u32 %s13, 4
      %s404 = int_to_ptr.hbm [resolvable:$true] %s403
      %409 = dma.vmem_to_hbm [thread:$0]  %s402, 256, %s404, [#allocation4], 128, 128, 8
    $region65: #{tpu_custom_call.1} parent=1 // pred_fallthru
      _
    // Predicated region
    $region66: #{tpu_custom_call.1} parent=1 // pred_check
      _
    $region67: #{tpu_custom_call.1} parent=1 // pred_check_branch
      %411 = sbr.rel (0) target = $region69
    $region68: #{tpu_custom_call.1} parent=1 // pred_region
      %413 = dma.done [#allocation4], 256
    $region69: #{tpu_custom_call.1} parent=1 // pred_fallthru
      _
    %414 = vsyncpa [#allocation3], 1
    %415 = vsyncpa [#allocation6], 1
    %416 = vsyncpa [#allocation4], 1

</llo_original>
